<compile_context>
chip_gen: v6e
topology: v6e:2x2x1
jax: 0.10.0
libtpu: 0.0.40
codegen_flags: <defaults>
</compile_context>

<pallas_src>
import functools
import math

import jax
import jax.numpy as jnp
from jax.experimental import pallas as pl
from jax.experimental.pallas import tpu as pltpu


def attention_kernel(r_ref, qp_ref, wr_ref, br_ref, v_ref, e_ref, u_ref, *, use_tanh, C):
    """One grid step processes a (TR, D) row block of the flattened encoder states.

    r_ref  : (TR, D)  rows l*B+b of ref (l-major flattening, contiguous HBM stream)
    qp_ref : (TR, D)  projected query, pre-tiled so row j holds qp[j % B] (constant block,
                      fetched once per core and kept VMEM-resident across the grid)
    wr_ref : (D, D)   Conv1d(k=1) weight, pre-transposed to (in_ch, out_ch)
    br_ref : (1, D)   Conv1d bias
    v_ref  : (D, 1)   attention vector as a column
    e_ref  : (TR, D)  out: projected refs (row l*B+b, channel o) == e_pt[b, o, l]
    u_ref  : (TR, 1)  out: logits column (row l*B+b == u_pt[b, l])
    """
    f32 = jnp.float32

    # project_ref: pointwise Conv1d == one 2-D MXU matmul on the row block
    e = jnp.dot(r_ref[...], wr_ref[...], preferred_element_type=f32) + br_ref[...]   # (TR, D)
    e_ref[...] = e.astype(e_ref.dtype)

    # tanh on the EUP (for small D this, not the MXU, is the saturating unit on v6e/v7x)
    t = jnp.tanh(e + qp_ref[...])                                                    # (TR, D)

    # v-contraction on the MXU; (TR, 1) output keeps the logits store / HBM traffic minimal
    u = jnp.dot(t, v_ref[...], preferred_element_type=f32)                           # (TR, 1)
    if use_tanh:
        u = C * jnp.tanh(u)
    u_ref[...] = u.astype(u_ref.dtype)


def _pick_rows_per_block(L, B, target_rows):
    """Largest TL dividing L with TL*B <= target_rows and TL*B % 8 == 0; else full L."""
    if L * B <= target_rows:
        return L
    max_tl = max(1, target_rows // B)
    for tl in range(min(L, max_tl), 0, -1):
        if L % tl == 0 and (tl * B) % 8 == 0:
            return tl
    return L  # fallback: single full-extent block (always layout-legal)


@functools.partial(jax.jit, static_argnames=("use_tanh", "C", "block_rows"))
def attention_forward(query, ref, wq, bq, wr, br, v, *, use_tanh=False, C=10.0,
                      block_rows=2048):
    """query: (B, D) f32, ref: (L, B, D) f32 (same layout as the PyTorch forward).

    wq, wr: (D, D) in PyTorch (out, in) layout; bq, br, v: (D,).
    Returns (e, logits) with e: (B, D, L), logits: (B, L) — identical to PyTorch.
    """
    L, B, D = ref.shape
    TL = _pick_rows_per_block(L, B, block_rows)           # ref rows (along L) per grid step
    TR = TL * B                                           # flattened rows per grid step
    n_blocks = L // TL

    # Native layout: (L, B, D) -> (L*B, D) is a contiguous (free) reshape, no HBM transpose.
    r_flat = ref.reshape(L * B, D)

    # project_query (nn.Linear): tiny (B,D)x(D,D) op done once here, then tiled to the block
    # row pattern (row j -> qp[j % B]).  Passed as a constant-index block so the kernel only
    # adds it — megacore-safe qp caching with zero per-step broadcast/gather work.
    qp = query @ wq.T + bq                                # (B, D)
    qp_blk = jnp.tile(qp, (TL, 1))                        # (TR, D)

    # Parameter prep (tiny; in a real decode loop these would be hoisted and done once).
    wr_t = wr.T                                           # (in_ch, out_ch)
    br2 = br.reshape(1, D)
    v_col = v.reshape(D, 1)

    kernel = functools.partial(attention_kernel, use_tanh=use_tanh, C=float(C))

    e_flat, u_col = pl.pallas_call(
        kernel,
        grid=(n_blocks,),
        in_specs=[
            pl.BlockSpec((TR, D), lambda i: (i, 0)),      # r_flat: streamed, double-buffered DMA
            pl.BlockSpec((TR, D), lambda i: (0, 0)),      # qp_blk: constant block, stays resident
            pl.BlockSpec((D, D), lambda i: (0, 0)),       # wr_t
            pl.BlockSpec((1, D), lambda i: (0, 0)),       # br
            pl.BlockSpec((D, 1), lambda i: (0, 0)),       # v (column)
        ],
        out_specs=(
            pl.BlockSpec((TR, D), lambda i: (i, 0)),      # e_flat
            pl.BlockSpec((TR, 1), lambda i: (i, 0)),      # logits column (narrow store)
        ),
        out_shape=(
            jax.ShapeDtypeStruct((L * B, D), jnp.float32),
            jax.ShapeDtypeStruct((L * B, 1), jnp.float32),
        ),
        compiler_params=pltpu.CompilerParams(
            dimension_semantics=("parallel",),            # shard L blocks across cores (v7x)
            vmem_limit_bytes=64 * 1024 * 1024,
        ),
    )(r_flat, qp_blk, wr_t, br2, v_col)

    # Layout plumbing required by the module contract (PyTorch returns (B, D, L) / (B, L)).
    e = jnp.transpose(e_flat.reshape(L, B, D), (1, 2, 0))                 # (B, D, L)
    logits = u_col.reshape(L, B).T                                        # (B, L)
    return e, logits


def reference_forward(query, ref, wq, bq, wr, br, v, *, use_tanh=False, C=10.0):
    """Plain-JAX reference mirroring the PyTorch code line by line."""
    ref_bdl = jnp.transpose(ref, (1, 2, 0))                            # (B, D, L)
    q = query @ wq.T + bq                                              # (B, D)
    e = jnp.einsum('od,bdl->bol', wr, ref_bdl) + br[None, :, None]     # (B, D, L)
    u = jnp.einsum('d,bdl->bl', v, jnp.tanh(q[:, :, None] + e))        # (B, L)
    logits = C * jnp.tanh(u) if use_tanh else u
    return e, logits


def _run_case(B, L, D, seed, block_rows):
    bound = 1.0 / math.sqrt(D)
    key = jax.random.PRNGKey(seed)
    kq, kr, kwq, kbq, kwr, kbr, kv = jax.random.split(key, 7)

    # Deterministic inputs (PyTorch forward: query (B, D), ref (L, B, D))
    query = jax.random.normal(kq, (B, D), dtype=jnp.float32)
    ref = jax.random.normal(kr, (L, B, D), dtype=jnp.float32)

    # Deterministic parameter init mirroring the module's __init__ shapes (PyTorch layouts)
    wq = jax.random.uniform(kwq, (D, D), jnp.float32, -bound, bound)   # Linear(dim, dim).weight
    bq = jax.random.uniform(kbq, (D,), jnp.float32, -bound, bound)     # Linear(dim, dim).bias
    wr = jax.random.uniform(kwr, (D, D), jnp.float32, -bound, bound)   # Conv1d(dim, dim, 1).weight
    br = jax.random.uniform(kbr, (D,), jnp.float32, -bound, bound)     # Conv1d bias
    v = jax.random.uniform(kv, (D,), jnp.float32, -bound, bound)       # v parameter

    ok = True
    for use_tanh in (False, True):
        e, logits = attention_forward(query, ref, wq, bq, wr, br, v,
                                      use_tanh=use_tanh, C=10.0, block_rows=block_rows)
        jax.block_until_ready((e, logits))
        e_ref, logits_ref = reference_forward(query, ref, wq, bq, wr, br, v,
                                              use_tanh=use_tanh, C=10.0)
        ok &= (e.shape == (B, D, L)) and (logits.shape == (B, L))
        ok &= bool(jnp.allclose(e, e_ref, atol=1e-5, rtol=1e-5))
        ok &= bool(jnp.allclose(logits, logits_ref, atol=1e-5, rtol=1e-5))
    return ok


if __name__ == "__main__":
    ok = True
    # Small canonical shape from the module (batch=2, source_length=8, hidden=32): single block.
    ok &= _run_case(B=2, L=8, D=32, seed=0, block_rows=2048)
    # Slightly larger case that exercises the gridded / double-buffered path (4 row blocks).
    ok &= _run_case(B=4, L=256, D=32, seed=1, block_rows=256)

    assert ok
    print("KERNEL_OK")
</pallas_src>

<mosaic_0001>
module attributes {stable_mosaic.version = 11 : i64} {
  func.func @attention_kernel(%arg0: i32, %arg1: memref<16x32xf32, #tpu.memory_space<vmem>>, %arg2: memref<16x32xf32, #tpu.memory_space<vmem>>, %arg3: memref<32x32xf32, #tpu.memory_space<vmem>>, %arg4: memref<1x32xf32, #tpu.memory_space<vmem>>, %arg5: memref<32x1xf32, #tpu.memory_space<vmem>>, %arg6: memref<16x32xf32, #tpu.memory_space<vmem>>, %arg7: memref<16x1xf32, #tpu.memory_space<vmem>>) attributes {dimension_semantics = [#tpu.dimension_semantics<parallel>], iteration_bounds = array<i64: 1>, scalar_prefetch = 0 : i64, scratch_operands = 0 : i64, tpu.core_type = #tpu.core_type<tc>, window_params = [{transform_indices = @transform_0, window_bounds = array<i64: 16, 32>}, {pipeline_mode = #tpu.pipeline_mode<synchronous>, transform_indices = @transform_1, window_bounds = array<i64: 16, 32>}, {pipeline_mode = #tpu.pipeline_mode<synchronous>, transform_indices = @transform_2, window_bounds = array<i64: 32, 32>}, {pipeline_mode = #tpu.pipeline_mode<synchronous>, transform_indices = @transform_3, window_bounds = array<i64: 1, 32>}, {pipeline_mode = #tpu.pipeline_mode<synchronous>, transform_indices = @transform_4, window_bounds = array<i64: 32, 1>}, {transform_indices = @transform_5, window_bounds = array<i64: 16, 32>}, {transform_indices = @transform_6, window_bounds = array<i64: 16, 1>}]} {
    %c0 = arith.constant 0 : index
    %c0_0 = arith.constant 0 : index
    %0 = vector.load %arg1[%c0, %c0_0] : memref<16x32xf32, #tpu.memory_space<vmem>>, vector<16x32xf32>
    %c0_1 = arith.constant 0 : index
    %c0_2 = arith.constant 0 : index
    %1 = vector.load %arg3[%c0_1, %c0_2] : memref<32x32xf32, #tpu.memory_space<vmem>>, vector<32x32xf32>
    %cst = arith.constant dense<0.000000e+00> : vector<16x32xf32>
    %2 = tpu.matmul %0, %1, %cst {dimension_numbers = #tpu.dot_dimension_numbers<[1], [0], [0], [1], [0, 0, 1, 1], [], []>} : vector<16x32xf32>, vector<32x32xf32>, vector<16x32xf32> -> vector<16x32xf32>
    %c0_3 = arith.constant 0 : index
    %c0_4 = arith.constant 0 : index
    %3 = vector.load %arg4[%c0_3, %c0_4] : memref<1x32xf32, #tpu.memory_space<vmem>>, vector<1x32xf32>
    %4 = vector.broadcast %3 : vector<1x32xf32> to vector<16x32xf32>
    %5 = arith.addf %2, %4 : vector<16x32xf32>
    %c0_5 = arith.constant 0 : index
    %c0_6 = arith.constant 0 : index
    %6 = vector.load %arg6[%c0_5, %c0_6] : memref<16x32xf32, #tpu.memory_space<vmem>>, vector<16x32xf32>
    tpu.vector_store %arg6[%c0_5, %c0_6], %5 {strides = array<i32>} : memref<16x32xf32, #tpu.memory_space<vmem>>, vector<16x32xf32>,
    %c0_7 = arith.constant 0 : index
    %c0_8 = arith.constant 0 : index
    %7 = vector.load %arg2[%c0_7, %c0_8] : memref<16x32xf32, #tpu.memory_space<vmem>>, vector<16x32xf32>
    %8 = arith.addf %5, %7 : vector<16x32xf32>
    %9 = math.tanh %8 : vector<16x32xf32>
    %c0_9 = arith.constant 0 : index
    %c0_10 = arith.constant 0 : index
    %10 = vector.load %arg5[%c0_9, %c0_10] : memref<32x1xf32, #tpu.memory_space<vmem>>, vector<32x1xf32>
    %cst_11 = arith.constant dense<0.000000e+00> : vector<16x1xf32>
    %11 = tpu.matmul %9, %10, %cst_11 {dimension_numbers = #tpu.dot_dimension_numbers<[1], [0], [0], [1], [0, 0, 1, 1], [], []>} : vector<16x32xf32>, vector<32x1xf32>, vector<16x1xf32> -> vector<16x1xf32>
    %c0_12 = arith.constant 0 : index
    %c0_13 = arith.constant 0 : index
    %12 = vector.load %arg7[%c0_12, %c0_13] : memref<16x1xf32, #tpu.memory_space<vmem>>, vector<16x1xf32>
    tpu.vector_store %arg7[%c0_12, %c0_13], %11 {strides = array<i32>} : memref<16x1xf32, #tpu.memory_space<vmem>>, vector<16x1xf32>,
    return
  }
  func.func @transform_0(%arg0: i32) -> (i32, i32) {
    %c0_i32 = arith.constant 0 : i32
    %c0_i32_0 = arith.constant 0 : i32
    return %arg0, %c0_i32 : i32, i32
  }
  func.func @transform_1(%arg0: i32) -> (i32, i32) {
    %c0_i32 = arith.constant 0 : i32
    %c0_i32_0 = arith.constant 0 : i32
    %c0_i32_1 = arith.constant 0 : i32
    return %c0_i32, %c0_i32_0 : i32, i32
  }
  func.func @transform_2(%arg0: i32) -> (i32, i32) {
    %c0_i32 = arith.constant 0 : i32
    %c0_i32_0 = arith.constant 0 : i32
    %c0_i32_1 = arith.constant 0 : i32
    return %c0_i32, %c0_i32_0 : i32, i32
  }
  func.func @transform_3(%arg0: i32) -> (i32, i32) {
    %c0_i32 = arith.constant 0 : i32
    %c0_i32_0 = arith.constant 0 : i32
    %c0_i32_1 = arith.constant 0 : i32
    return %c0_i32, %c0_i32_0 : i32, i32
  }
  func.func @transform_4(%arg0: i32) -> (i32, i32) {
    %c0_i32 = arith.constant 0 : i32
    %c0_i32_0 = arith.constant 0 : i32
    %c0_i32_1 = arith.constant 0 : i32
    return %c0_i32, %c0_i32_0 : i32, i32
  }
  func.func @transform_5(%arg0: i32) -> (i32, i32) {
    %c0_i32 = arith.constant 0 : i32
    %c0_i32_0 = arith.constant 0 : i32
    return %arg0, %c0_i32 : i32, i32
  }
  func.func @transform_6(%arg0: i32) -> (i32, i32) {
    %c0_i32 = arith.constant 0 : i32
    %c0_i32_0 = arith.constant 0 : i32
    return %arg0, %c0_i32 : i32, i32
  }
}

</mosaic_0001>

<llo_original>
// kernel: attention_forward.1
$region0: #{attention_forward.1}
  #allocation0 [shape = 'u32[]', space=smem, size = 0x4, offset = 0x4, fixed_abs, tag = 'smem constant byte address 0x4 - core index']
  #allocation1 [shape = 'u32[144,128]{1,0:T(1,128)}', space=vmem, size = 0x12000, scoped, tag = 'internal scratch']
  %s0 = inlined_call_operand.vmem [shape: f32[16,32], index: 0, kind: input, shape index: {}]
  %s1 = inlined_call_operand.vmem [shape: f32[16,32], index: 1, kind: input, shape index: {}]
  %s2 = inlined_call_operand.vmem [shape: f32[32,32], index: 2, kind: input, shape index: {}]
  %s3 = inlined_call_operand.vmem [shape: f32[1,32], index: 3, kind: input, shape index: {}]
  %s4 = inlined_call_operand.vmem [shape: f32[32,1], index: 4, kind: input, shape index: {}]
  %s5 = inlined_call_operand.vmem [shape: f32[16,32], index: 5, kind: output, shape index: {0}]
  %s6 = inlined_call_operand.vmem [shape: f32[16,1], index: 6, kind: output, shape index: {1}]
  %7 = xla_tuple %s5, %s6
  %s8 = sld [smem:[#allocation0]]
  $region38: #{attention_forward.1} parent=0
    _
  %s10 = ssub.s32 1, %s8
  %s11 = scalar_select 0, %s10, %s8
  // Predicated region
  $region2: #{attention_forward.1} parent=0 // pred_check
    _
  $region3: #{attention_forward.1} parent=0 // pred_check_branch
    %13 = sbr.rel (0) target = $region5
  $region4: #{attention_forward.1} parent=0 // pred_region
    _
  $region5: #{attention_forward.1} parent=0 // pred_fallthru
    _
  // Predicated region
  $region6: #{attention_forward.1} parent=0 // pred_check
    _
  $region7: #{attention_forward.1} parent=0 // pred_check_branch
    %15 = sbr.rel (0) target = $region9
  $region8: #{attention_forward.1} parent=0 // pred_region
    _
  $region9: #{attention_forward.1} parent=0 // pred_fallthru
    _
  // Predicated region
  $region10: #{attention_forward.1} parent=0 // pred_check
    _
  $region11: #{attention_forward.1} parent=0 // pred_check_branch
    %17 = sbr.rel (0) target = $region13
  $region12: #{attention_forward.1} parent=0 // pred_region
    _
  $region13: #{attention_forward.1} parent=0 // pred_fallthru
    _
  // Predicated region
  $region14: #{attention_forward.1} parent=0 // pred_check
    _
  $region15: #{attention_forward.1} parent=0 // pred_check_branch
    %19 = sbr.rel (0) target = $region17
  $region16: #{attention_forward.1} parent=0 // pred_region
    _
  $region17: #{attention_forward.1} parent=0 // pred_fallthru
    _
  // Predicated region
  $region18: #{attention_forward.1} parent=0 // pred_check
    _
  $region19: #{attention_forward.1} parent=0 // pred_check_branch
    %21 = sbr.rel (0) target = $region21
  $region20: #{attention_forward.1} parent=0 // pred_region
    _
  $region21: #{attention_forward.1} parent=0 // pred_fallthru
    _
  %v22 = vld [vmem:[%s0] sm:$0xff]
  %v23 = vld [vmem:[%s0 + $0x8] sm:$0xff]
  %v24 = vld [vmem:[%s2] sm:$0xff]
  %v25 = vld [vmem:[%s2 + $0x8] sm:$0xff]
  %v26 = vld [vmem:[%s2 + $0x10] sm:$0xff]
  %v27 = vld [vmem:[%s2 + $0x18] sm:$0xff]
  %v28 = vld [vmem:[%s3] sm:$0x1]
  %v30 = vlaneseq
  %v31 = vshrl.u32 %v30, 7
  %v32 = vsub.s32 0, %v31
  %v33 = vrot.slane %v28, %v32
  %vm35 = vcmask 261120
  %v37 = vsel %vm35, %v22, 0
  %v40 = vsel %vm35, %v23, 0
  %42 = vmatprep.subr.mxu0 0.0
  %43 = vmatpush1.msra.mxu0 0.0
  %44 = vmatprep.subr.mxu0 0.0
  %45 = vmatpush1.msra.mxu0 0.0
  %46 = vmatprep.subr.mxu0 0.0
  %47 = vmatpush1.msra.mxu0 0.0
  %48 = vmatprep.subr.mxu0 0.0
  %49 = vmatpush1.msra.mxu0 0.0
  %50 = vmatprep.subr.mxu0 0.0
  %51 = vmatpush1.msra.mxu0 0.0
  %52 = vmatprep.subr.mxu0 0.0
  %53 = vmatpush1.msra.mxu0 0.0
  %54 = vmatprep.subr.mxu0 0.0
  %55 = vmatpush1.msra.mxu0 0.0
  %56 = vmatprep.subr.mxu0 0.0
  %57 = vmatpush1.msra.mxu0 0.0
  %58 = vmatprep.subr.mxu0 0.0
  %59 = vmatpush1.msra.mxu0 0.0
  %60 = vmatprep.subr.mxu0 0.0
  %61 = vmatpush1.msra.mxu0 0.0
  %62 = vmatprep.subr.mxu0 0.0
  %63 = vmatpush1.msra.mxu0 0.0
  %64 = vmatprep.subr.mxu0 0.0
  %65 = vmatpush1.msra.mxu0 0.0
  %66 = vmatprep.subr.mxu0 0.0
  %67 = vmatpush1.msra.mxu0 %v27
  %68 = vmatprep.subr.mxu0 0.0
  %69 = vmatpush1.msra.mxu0 %v26
  %70 = vmatprep.subr.mxu0 0.0
  %71 = vmatpush1.msra.mxu0 %v25
  %72 = vmatprep.subr.mxu0 0.0
  %73 = vmatpush1.msra.mxu0 %v24
  %74 = vmatprep.subr.mxu0 0.0
  %75 = vmatpush2.msra.mxu0 0.0
  %76 = vmatprep.subr.mxu0 0.0
  %77 = vmatpush2.msra.mxu0 0.0
  %78 = vmatprep.subr.mxu0 0.0
  %79 = vmatpush2.msra.mxu0 0.0
  %80 = vmatprep.subr.mxu0 0.0
  %81 = vmatpush2.msra.mxu0 0.0
  %82 = vmatprep.subr.mxu0 0.0
  %83 = vmatpush2.msra.mxu0 0.0
  %84 = vmatprep.subr.mxu0 0.0
  %85 = vmatpush2.msra.mxu0 0.0
  %86 = vmatprep.subr.mxu0 0.0
  %87 = vmatpush2.msra.mxu0 0.0
  %88 = vmatprep.subr.mxu0 0.0
  %89 = vmatpush2.msra.mxu0 0.0
  %90 = vmatprep.subr.mxu0 0.0
  %91 = vmatpush2.msra.mxu0 0.0
  %92 = vmatprep.subr.mxu0 0.0
  %93 = vmatpush2.msra.mxu0 0.0
  %94 = vmatprep.subr.mxu0 0.0
  %95 = vmatpush2.msra.mxu0 0.0
  %96 = vmatprep.subr.mxu0 0.0
  %97 = vmatpush2.msra.mxu0 0.0
  %98 = vmatprep.subr.mxu0 0.0
  %99 = vmatpush2.msra.mxu0 0.0
  %100 = vmatprep.subr.mxu0 0.0
  %101 = vmatpush2.msra.mxu0 0.0
  %102 = vmatprep.subr.mxu0 0.0
  %103 = vmatpush2.msra.mxu0 0.0
  %104 = vmatprep.subr.mxu0 0.0
  %105 = vmatpush2.msra.mxu0 0.0
  %106 = vmatprep.mubr.f32.mxu0 0.0
  %107 = vmatmul.mubr.f32.gmra.mxu0 %v37
  %v108 = vpop.f32.mrf.mxu0
  %v109 = vadd.f32 %v33, %v108
  %v110 = vpop.f32.mrf.mxu0
  %111 = vmatprep.mubr.f32.mxu0 0.0
  %112 = vmatmul.mubr.f32.gmra.mxu0 %v40
  %v113 = vpop.f32.mrf.mxu0
  %v114 = vadd.f32 %v33, %v113
  %v115 = vpop.f32.mrf.mxu0
  %116 = vdwg.mxu0
  %117 = vst.msk [vmem:[%s5] sm:$0xff] %vm35, %v109
  %118 = vst.msk [vmem:[%s5 + $0x8] sm:$0xff] %vm35, %v114
  %v119 = vld [vmem:[%s1] sm:$0xff]
  %v120 = vld [vmem:[%s1 + $0x8] sm:$0xff]
  %v121 = vadd.f32 %v109, %v119
  %v122 = vadd.f32 %v114, %v120
  %v123 = vtanh.pop %v121
  %v124 = vtanh.pop %v122
  %v125 = vld [vmem:[%s4] sm:$0xff]
  %v126 = vld [vmem:[%s4 + $0x8] sm:$0xff]
  %v127 = vld [vmem:[%s4 + $0x10] sm:$0xff]
  %v128 = vld [vmem:[%s4 + $0x18] sm:$0xff]
  %v130 = vsel %vm35, %v123, 0
  %v133 = vsel %vm35, %v124, 0
  %135 = vmatprep.subr.mxu0 0.0
  %136 = vmatpush1.msra.mxu0 0.0
  %137 = vmatprep.subr.mxu0 0.0
  %138 = vmatpush1.msra.mxu0 0.0
  %139 = vmatprep.subr.mxu0 0.0
  %140 = vmatpush1.msra.mxu0 0.0
  %141 = vmatprep.subr.mxu0 0.0
  %142 = vmatpush1.msra.mxu0 0.0
  %143 = vmatprep.subr.mxu0 0.0
  %144 = vmatpush1.msra.mxu0 0.0
  %145 = vmatprep.subr.mxu0 0.0
  %146 = vmatpush1.msra.mxu0 0.0
  %147 = vmatprep.subr.mxu0 0.0
  %148 = vmatpush1.msra.mxu0 0.0
  %149 = vmatprep.subr.mxu0 0.0
  %150 = vmatpush1.msra.mxu0 0.0
  %151 = vmatprep.subr.mxu0 0.0
  %152 = vmatpush1.msra.mxu0 0.0
  %153 = vmatprep.subr.mxu0 0.0
  %154 = vmatpush1.msra.mxu0 0.0
  %155 = vmatprep.subr.mxu0 0.0
  %156 = vmatpush1.msra.mxu0 0.0
  %157 = vmatprep.subr.mxu0 0.0
  %158 = vmatpush1.msra.mxu0 0.0
  %159 = vmatprep.subr.mxu0 0.0
  %160 = vmatpush1.msra.mxu0 %v128
  %161 = vmatprep.subr.mxu0 0.0
  %162 = vmatpush1.msra.mxu0 %v127
  %163 = vmatprep.subr.mxu0 0.0
  %164 = vmatpush1.msra.mxu0 %v126
  %165 = vmatprep.subr.mxu0 0.0
  %166 = vmatpush1.msra.mxu0 %v125
  %167 = vmatprep.subr.mxu0 0.0
  %168 = vmatpush2.msra.mxu0 0.0
  %169 = vmatprep.subr.mxu0 0.0
  %170 = vmatpush2.msra.mxu0 0.0
  %171 = vmatprep.subr.mxu0 0.0
  %172 = vmatpush2.msra.mxu0 0.0
  %173 = vmatprep.subr.mxu0 0.0
  %174 = vmatpush2.msra.mxu0 0.0
  %175 = vmatprep.subr.mxu0 0.0
  %176 = vmatpush2.msra.mxu0 0.0
  %177 = vmatprep.subr.mxu0 0.0
  %178 = vmatpush2.msra.mxu0 0.0
  %179 = vmatprep.subr.mxu0 0.0
  %180 = vmatpush2.msra.mxu0 0.0
  %181 = vmatprep.subr.mxu0 0.0
  %182 = vmatpush2.msra.mxu0 0.0
  %183 = vmatprep.subr.mxu0 0.0
  %184 = vmatpush2.msra.mxu0 0.0
  %185 = vmatprep.subr.mxu0 0.0
  %186 = vmatpush2.msra.mxu0 0.0
  %187 = vmatprep.subr.mxu0 0.0
  %188 = vmatpush2.msra.mxu0 0.0
  %189 = vmatprep.subr.mxu0 0.0
  %190 = vmatpush2.msra.mxu0 0.0
  %191 = vmatprep.subr.mxu0 0.0
  %192 = vmatpush2.msra.mxu0 0.0
  %193 = vmatprep.subr.mxu0 0.0
  %194 = vmatpush2.msra.mxu0 0.0
  %195 = vmatprep.subr.mxu0 0.0
  %196 = vmatpush2.msra.mxu0 0.0
  %197 = vmatprep.subr.mxu0 0.0
  %198 = vmatpush2.msra.mxu0 0.0
  %199 = vmatprep.mubr.f32.mxu0 0.0
  %200 = vmatmul.mubr.f32.gmra.mxu0 %v130
  %v201 = vpop.f32.mrf.mxu0
  %v202 = vadd.f32 0.0, %v201
  %v203 = vpop.f32.mrf.mxu0
  %204 = vmatprep.mubr.f32.mxu0 0.0
  %205 = vmatmul.mubr.f32.gmra.mxu0 %v133
  %v206 = vpop.f32.mrf.mxu0
  %v207 = vadd.f32 0.0, %v206
  %v208 = vpop.f32.mrf.mxu0
  %209 = vdwg.mxu0
  %vm210 = vcmask 7168
  %211 = vst.msk [vmem:[%s6] sm:$0xff] %vm210, %v202
  %212 = vst.msk [vmem:[%s6 + $0x8] sm:$0xff] %vm210, %v207
  // Predicated region
  $region22: #{attention_forward.1} parent=0 // pred_check
    _
  $region23: #{attention_forward.1} parent=0 // pred_check_branch
    %214 = sbr.rel (0) target = $region25
  $region24: #{attention_forward.1} parent=0 // pred_region
    _
  $region25: #{attention_forward.1} parent=0 // pred_fallthru
    _
  // Predicated region
  $region26: #{attention_forward.1} parent=0 // pred_check
    _
  $region27: #{attention_forward.1} parent=0 // pred_check_branch
    %216 = sbr.rel (0) target = $region29
  $region28: #{attention_forward.1} parent=0 // pred_region
    _
  $region29: #{attention_forward.1} parent=0 // pred_fallthru
    _
  // Predicated region
  $region30: #{attention_forward.1} parent=0 // pred_check
    _
  $region31: #{attention_forward.1} parent=0 // pred_check_branch
    %218 = sbr.rel (0) target = $region33
  $region32: #{attention_forward.1} parent=0 // pred_region
    _
  $region33: #{attention_forward.1} parent=0 // pred_fallthru
    _
  // Predicated region
  $region34: #{attention_forward.1} parent=0 // pred_check
    _
  $region35: #{attention_forward.1} parent=0 // pred_check_branch
    %220 = sbr.rel (0) target = $region37
  $region36: #{attention_forward.1} parent=0 // pred_region
    _
  $region37: #{attention_forward.1} parent=0 // pred_fallthru
    _

</llo_original>
